<compile_context>
chip_gen: v7x
topology: tpu7x:2x2x1
jax: 0.10.0
libtpu: 0.0.40
codegen_flags: <defaults>
</compile_context>

<pallas_src>
import functools
from itertools import combinations

import jax
import jax.numpy as jnp
import numpy as np
from jax.experimental import pallas as pl
from jax.experimental.pallas import tpu as pltpu

LANE = 128


def _round_up(x, m):
    return ((x + m - 1) // m) * m


def ain_kernel(x_ref, w_aug_ref, w2_ref, out_ref, att_ref, *, pairs):
    """One batch tile (batch on lanes).

    x_ref     : (F, D, TB)       feature embeddings, batch lane-dense
    w_aug_ref : (HR + P, P*D+1)  block-diag [w1^T | b1] (rows 0..HR) and block-diag wp (last P rows)
    w2_ref    : (P, HR)          block-diag w2 (attention Linear(A->1))
    out_ref   : (1, TB)          ain_out (transposed)
    att_ref   : (P, TB)          attention weights (transposed)
    """
    P = att_ref.shape[0]
    HR = w2_ref.shape[-1]          # P*A rounded up to a sublane multiple (8)
    F = x_ref.shape[0]
    TB = x_ref.shape[-1]

    # Load each field plane once (F loads instead of 2*P).
    xs = [x_ref[f] for f in range(F)]                                   # each (D, TB)

    # Stacked pairwise products on the sublane axis + a ones row that carries the
    # attention-MLP bias through the fused matmul: (P*D + 1, TB).
    e_all = jnp.concatenate(
        [xs[p] * xs[q] for (p, q) in pairs] + [jnp.ones((1, TB), jnp.float32)],
        axis=0,
    )

    # Single block-diagonal matmul:
    #   rows [0, HR)      -> per-pair hidden pre-activations (bias already added)
    #   rows [HR, HR + P) -> per-pair fused weight_p projection ew_p = wp . e_p
    hw = jnp.dot(w_aug_ref[...], e_all, preferred_element_type=jnp.float32)  # (HR+P, TB)
    h = jnp.maximum(hw[:HR, :], 0.0)                                         # (HR, TB)
    ew = hw[HR:, :]                                                          # (P, TB)

    # Per-pair attention logits (second block-diagonal matmul).
    logits = jnp.dot(w2_ref[...], h, preferred_element_type=jnp.float32)     # (P, TB)

    # Softmax across the pair (sublane) axis -- cheap XLU reduce over P rows.
    m = jnp.max(logits, axis=0, keepdims=True)                               # (1, TB)
    ex = jnp.exp(logits - m)                                                 # (P, TB)
    denom = jnp.sum(ex, axis=0, keepdims=True)                               # (1, TB)
    att = ex * pl.reciprocal(denom, approx=True)                             # (P, TB)

    att_ref[...] = att                                                       # one lane-dense store
    out_ref[...] = jnp.sum(att * ew, axis=0, keepdims=True)                  # (1, TB)


def ain_forward(feature_emb, pairs, w1, b1, w2, wp, *, block_b=4096):
    """feature_emb: (B, F, D) f32.  Returns (ain_out (B, 1), attention_weight (B, P, 1))."""
    B, F, D = feature_emb.shape
    A = w1.shape[1]
    P = len(pairs)
    HR = _round_up(P * A, 8)           # pad h rows so the in-kernel slices are sublane-aligned

    # Batch tile on the lane axis.  Ensure >= 2 tiles when B is large so both
    # TensorCores get work on v7x (grid axis is "parallel").
    TB = min(block_b, _round_up(B, LANE))
    if B > LANE and pl.cdiv(B, TB) < 2:
        TB = max(LANE, _round_up(pl.cdiv(B, 2), LANE))
    grid = (pl.cdiv(B, TB),)           # no explicit batch pad: Pallas masks the edge block

    # Layout plumbing: batch on the lane (last) axis.
    # TODO(synk): produce this (F, D, B) layout upstream in a real model.
    x_t = jnp.transpose(feature_emb, (1, 2, 0))                              # (F, D, B)

    # Fused block-diagonal weights (tiny; precompute/cache once in a real model).
    w1t = w1.T                                                               # (A, D)
    eye_p = jnp.eye(P, dtype=jnp.float32)
    top = jnp.concatenate(
        [jnp.kron(eye_p, w1t), jnp.tile(b1, P)[:, None]], axis=1)            # (P*A, P*D+1)
    top = jnp.pad(top, ((0, HR - P * A), (0, 0)))                            # (HR,  P*D+1)
    bot = jnp.concatenate(
        [jnp.kron(eye_p, wp[None, :]), jnp.zeros((P, 1), jnp.float32)], axis=1)  # (P, P*D+1)
    w_aug = jnp.concatenate([top, bot], axis=0)                              # (HR+P, P*D+1)
    w2_bd = jnp.pad(jnp.kron(eye_p, w2[None, :]), ((0, 0), (0, HR - P * A))) # (P, HR)

    # VMEM budget from *padded* tile shapes (sublane -> 8, lane -> 128), f32.
    f32 = 4
    d_pad = _round_up(D, 8)
    e_rows = _round_up(P * D + 1, 8)
    hw_rows = _round_up(HR + P, 8)
    p_pad = _round_up(P, 8)
    blk_in = 2 * F * d_pad * TB * f32                                        # double-buffered input
    blk_out = 2 * (8 + p_pad) * TB * f32                                     # double-buffered outputs
    blk_w = 2 * (hw_rows * _round_up(P * D + 1, LANE)
                 + p_pad * _round_up(HR, LANE)) * f32                        # resident weights
    interm = (e_rows + hw_rows + HR + 4 * p_pad) * TB * f32                  # e_all, hw, h, att/logits
    vmem_limit = int(min(48 * 2**20, max(16 * 2**20,
                                         2 * (blk_in + blk_out + blk_w + interm))))

    kernel = functools.partial(ain_kernel, pairs=tuple(tuple(pq) for pq in pairs))

    out_t, att_t = pl.pallas_call(
        kernel,
        out_shape=(
            jax.ShapeDtypeStruct((1, B), jnp.float32),                       # ain_out^T
            jax.ShapeDtypeStruct((P, B), jnp.float32),                       # attention^T
        ),
        grid=grid,
        in_specs=[
            pl.BlockSpec((F, D, TB), lambda i: (0, 0, i)),                   # feature_emb (F, D, B)
            pl.BlockSpec((HR + P, P * D + 1), lambda i: (0, 0)),             # fused W_aug (resident)
            pl.BlockSpec((P, HR), lambda i: (0, 0)),                         # fused W2    (resident)
        ],
        out_specs=(
            pl.BlockSpec((1, TB), lambda i: (0, i)),
            pl.BlockSpec((P, TB), lambda i: (0, i)),
        ),
        compiler_params=pltpu.CompilerParams(
            dimension_semantics=("parallel",),                               # shard batch tiles across TCs
            vmem_limit_bytes=vmem_limit,
        ),
    )(x_t, w_aug, w2_bd)

    ain_out = out_t[0, :][:, None]                                           # (B, 1)
    att_w = jnp.transpose(att_t)[:, :, None]                                 # (B, P, 1)
    return ain_out, att_w


def reference_forward(feature_emb, pairs, w1, b1, w2, wp):
    p_idx = jnp.asarray(np.array([p for p, _ in pairs], dtype=np.int32))
    q_idx = jnp.asarray(np.array([q for _, q in pairs], dtype=np.int32))
    emb1 = jnp.take(feature_emb, p_idx, axis=1)
    emb2 = jnp.take(feature_emb, q_idx, axis=1)
    e = emb1 * emb2
    h = jnp.maximum(jnp.einsum('bpd,da->bpa', e, w1) + b1, 0.0)
    logits = jnp.einsum('bpa,a->bp', h, w2)
    att = jax.nn.softmax(logits, axis=1)[..., None]
    att_sum = jnp.sum(att * e, axis=1)
    out = jnp.einsum('bd,d->b', att_sum, wp)[:, None]
    return out, att


if __name__ == "__main__":
    key = jax.random.PRNGKey(0)
    B, F, D, A = 2, 4, 10, 10               # batch, fields, embedding_dim, attention_dim

    pairs = list(combinations(range(F), 2))  # all field pairs (AFM setup), P = 6

    k1, k2, k3, k4, k5 = jax.random.split(key, 5)
    feature_emb = jax.random.normal(k1, (B, F, D), dtype=jnp.float32)
    # deterministic synthetic parameters (shapes match the nn.Linear layers in __init__)
    w1 = jax.random.normal(k2, (D, A), dtype=jnp.float32) * 0.1   # attention Linear(D, A) weight^T
    b1 = jax.random.normal(k3, (A,), dtype=jnp.float32) * 0.1     # attention Linear(D, A) bias
    w2 = jax.random.normal(k4, (A,), dtype=jnp.float32) * 0.1     # attention Linear(A, 1, bias=False)
    wp = jax.random.normal(k5, (D,), dtype=jnp.float32) * 0.1     # weight_p Linear(D, 1, bias=False)

    ain_out, att_w = ain_forward(feature_emb, pairs, w1, b1, w2, wp)
    jax.block_until_ready((ain_out, att_w))

    ref_out, ref_att = reference_forward(feature_emb, pairs, w1, b1, w2, wp)
    # tolerance relaxed to 2e-3 for the approximate (EUP) softmax reciprocal
    np.testing.assert_allclose(np.asarray(ain_out), np.asarray(ref_out), rtol=2e-3, atol=2e-3)
    np.testing.assert_allclose(np.asarray(att_w), np.asarray(ref_att), rtol=2e-3, atol=2e-3)

    print("KERNEL_OK")
</pallas_src>

<mosaic_0001>
module attributes {stable_mosaic.version = 11 : i64} {
  func.func @ain_kernel(%arg0: i32, %arg1: memref<4x10x128xf32, #tpu.memory_space<vmem>>, %arg2: memref<70x61xf32, #tpu.memory_space<vmem>>, %arg3: memref<6x64xf32, #tpu.memory_space<vmem>>, %arg4: memref<1x128xf32, #tpu.memory_space<vmem>>, %arg5: memref<6x128xf32, #tpu.memory_space<vmem>>) attributes {dimension_semantics = [#tpu.dimension_semantics<parallel>], iteration_bounds = array<i64: 1>, scalar_prefetch = 0 : i64, scratch_operands = 0 : i64, tpu.core_type = #tpu.core_type<tc>, window_params = [{transform_indices = @transform_0, window_bounds = array<i64: 4, 10, 128>}, {pipeline_mode = #tpu.pipeline_mode<synchronous>, transform_indices = @transform_1, window_bounds = array<i64: 70, 61>}, {pipeline_mode = #tpu.pipeline_mode<synchronous>, transform_indices = @transform_2, window_bounds = array<i64: 6, 64>}, {transform_indices = @transform_3, window_bounds = array<i64: 1, 128>}, {transform_indices = @transform_4, window_bounds = array<i64: 6, 128>}]} {
    %c0 = arith.constant 0 : index
    %c0_0 = arith.constant 0 : index
    %c0_1 = arith.constant 0 : index
    %0 = vector.load %arg1[%c0, %c0_0, %c0_1] : memref<4x10x128xf32, #tpu.memory_space<vmem>>, vector<1x10x128xf32>
    %1 = vector.shape_cast %0 : vector<1x10x128xf32> to vector<10x128xf32>
    %c1 = arith.constant 1 : index
    %c0_2 = arith.constant 0 : index
    %c0_3 = arith.constant 0 : index
    %2 = vector.load %arg1[%c1, %c0_2, %c0_3] : memref<4x10x128xf32, #tpu.memory_space<vmem>>, vector<1x10x128xf32>
    %3 = vector.shape_cast %2 : vector<1x10x128xf32> to vector<10x128xf32>
    %c2 = arith.constant 2 : index
    %c0_4 = arith.constant 0 : index
    %c0_5 = arith.constant 0 : index
    %4 = vector.load %arg1[%c2, %c0_4, %c0_5] : memref<4x10x128xf32, #tpu.memory_space<vmem>>, vector<1x10x128xf32>
    %5 = vector.shape_cast %4 : vector<1x10x128xf32> to vector<10x128xf32>
    %c3 = arith.constant 3 : index
    %c0_6 = arith.constant 0 : index
    %c0_7 = arith.constant 0 : index
    %6 = vector.load %arg1[%c3, %c0_6, %c0_7] : memref<4x10x128xf32, #tpu.memory_space<vmem>>, vector<1x10x128xf32>
    %7 = vector.shape_cast %6 : vector<1x10x128xf32> to vector<10x128xf32>
    %8 = arith.mulf %1, %3 : vector<10x128xf32>
    %9 = arith.mulf %1, %5 : vector<10x128xf32>
    %10 = arith.mulf %1, %7 : vector<10x128xf32>
    %11 = arith.mulf %3, %5 : vector<10x128xf32>
    %12 = arith.mulf %3, %7 : vector<10x128xf32>
    %13 = arith.mulf %5, %7 : vector<10x128xf32>
    %cst = arith.constant 1.000000e+00 : f32
    %14 = vector.broadcast %cst : f32 to vector<1x128xf32>
    %15 = tpu.concatenate %8, %9, %10, %11, %12, %13, %14 in 0 : vector<10x128xf32>, vector<10x128xf32>, vector<10x128xf32>, vector<10x128xf32>, vector<10x128xf32>, vector<10x128xf32>, vector<1x128xf32> -> vector<61x128xf32>
    %c0_8 = arith.constant 0 : index
    %c0_9 = arith.constant 0 : index
    %16 = vector.load %arg2[%c0_8, %c0_9] : memref<70x61xf32, #tpu.memory_space<vmem>>, vector<70x61xf32>
    %cst_10 = arith.constant dense<0.000000e+00> : vector<70x128xf32>
    %17 = tpu.matmul %16, %15, %cst_10 {dimension_numbers = #tpu.dot_dimension_numbers<[1], [0], [0], [1], [0, 0, 1, 1], [], []>} : vector<70x61xf32>, vector<61x128xf32>, vector<70x128xf32> -> vector<70x128xf32>
    %18 = vector.extract_strided_slice %17 {offsets = [0, 0], sizes = [64, 128], strides = [1, 1]} : vector<70x128xf32> to vector<64x128xf32>
    %cst_11 = arith.constant 0.000000e+00 : f32
    %19 = vector.broadcast %cst_11 : f32 to vector<64x128xf32>
    %20 = arith.maximumf %18, %19 : vector<64x128xf32>
    %21 = vector.extract_strided_slice %17 {offsets = [64, 0], sizes = [6, 128], strides = [1, 1]} : vector<70x128xf32> to vector<6x128xf32>
    %c0_12 = arith.constant 0 : index
    %c0_13 = arith.constant 0 : index
    %22 = vector.load %arg3[%c0_12, %c0_13] : memref<6x64xf32, #tpu.memory_space<vmem>>, vector<6x64xf32>
    %cst_14 = arith.constant dense<0.000000e+00> : vector<6x128xf32>
    %23 = tpu.matmul %22, %20, %cst_14 {dimension_numbers = #tpu.dot_dimension_numbers<[1], [0], [0], [1], [0, 0, 1, 1], [], []>} : vector<6x64xf32>, vector<64x128xf32>, vector<6x128xf32> -> vector<6x128xf32>
    %cst_15 = arith.constant dense<0xFF800000> : vector<128xf32>
    %24 = vector.multi_reduction <maximumf>, %23, %cst_15 [0] : vector<6x128xf32> to vector<128xf32>
    %25 = vector.shape_cast %24 : vector<128xf32> to vector<1x128xf32>
    %26 = vector.broadcast %25 : vector<1x128xf32> to vector<6x128xf32>
    %27 = arith.subf %23, %26 : vector<6x128xf32>
    %28 = math.exp %27 : vector<6x128xf32>
    %cst_16 = arith.constant dense<0.000000e+00> : vector<128xf32>
    %29 = vector.multi_reduction <add>, %28, %cst_16 [0] : vector<6x128xf32> to vector<128xf32>
    %30 = vector.shape_cast %29 : vector<128xf32> to vector<1x128xf32>
    %31 = tpu.reciprocal %30 {approx = true} : vector<1x128xf32> -> vector<1x128xf32>
    %32 = vector.broadcast %31 : vector<1x128xf32> to vector<6x128xf32>
    %33 = arith.mulf %28, %32 : vector<6x128xf32>
    %c0_17 = arith.constant 0 : index
    %c0_18 = arith.constant 0 : index
    %34 = vector.load %arg5[%c0_17, %c0_18] : memref<6x128xf32, #tpu.memory_space<vmem>>, vector<6x128xf32>
    tpu.vector_store %arg5[%c0_17, %c0_18], %33 {strides = array<i32>} : memref<6x128xf32, #tpu.memory_space<vmem>>, vector<6x128xf32>,
    %35 = arith.mulf %33, %21 : vector<6x128xf32>
    %cst_19 = arith.constant dense<0.000000e+00> : vector<128xf32>
    %36 = vector.multi_reduction <add>, %35, %cst_19 [0] : vector<6x128xf32> to vector<128xf32>
    %37 = vector.shape_cast %36 : vector<128xf32> to vector<1x128xf32>
    %c0_20 = arith.constant 0 : index
    %c0_21 = arith.constant 0 : index
    %38 = vector.load %arg4[%c0_20, %c0_21] : memref<1x128xf32, #tpu.memory_space<vmem>>, vector<1x128xf32>
    tpu.vector_store %arg4[%c0_20, %c0_21], %37 {strides = array<i32>} : memref<1x128xf32, #tpu.memory_space<vmem>>, vector<1x128xf32>,
    return
  }
  func.func @transform_0(%arg0: i32) -> (i32, i32, i32) {
    %c0_i32 = arith.constant 0 : i32
    %c0_i32_0 = arith.constant 0 : i32
    %c0_i32_1 = arith.constant 0 : i32
    return %c0_i32, %c0_i32_0, %arg0 : i32, i32, i32
  }
  func.func @transform_1(%arg0: i32) -> (i32, i32) {
    %c0_i32 = arith.constant 0 : i32
    %c0_i32_0 = arith.constant 0 : i32
    %c0_i32_1 = arith.constant 0 : i32
    return %c0_i32, %c0_i32_0 : i32, i32
  }
  func.func @transform_2(%arg0: i32) -> (i32, i32) {
    %c0_i32 = arith.constant 0 : i32
    %c0_i32_0 = arith.constant 0 : i32
    %c0_i32_1 = arith.constant 0 : i32
    return %c0_i32, %c0_i32_0 : i32, i32
  }
  func.func @transform_3(%arg0: i32) -> (i32, i32) {
    %c0_i32 = arith.constant 0 : i32
    %c0_i32_0 = arith.constant 0 : i32
    return %c0_i32, %arg0 : i32, i32
  }
  func.func @transform_4(%arg0: i32) -> (i32, i32) {
    %c0_i32 = arith.constant 0 : i32
    %c0_i32_0 = arith.constant 0 : i32
    return %c0_i32, %arg0 : i32, i32
  }
}

</mosaic_0001>

<llo_original>
// kernel: tpu_custom_call.1
$region0: #{tpu_custom_call.1}
  #allocation0 [shape = 'u32[]', space=smem, size = 0x4, offset = 0x4, fixed_abs, tag = 'smem constant byte address 0x4 - core index']
  #allocation1 [shape = 'u32[144,128]{1,0:T(1,128)}', space=vmem, size = 0x12000, scoped, tag = 'internal scratch']
  %s0 = inlined_call_operand.vmem [shape: f32[4,10,2], index: 0, kind: input, shape index: {}]
  %s1 = inlined_call_operand.vmem [shape: f32[70,61], index: 1, kind: input, shape index: {}]
  %s2 = inlined_call_operand.vmem [shape: f32[6,64], index: 2, kind: input, shape index: {}]
  %s3 = inlined_call_operand.hbm [shape: f32[1,2], index: 3, kind: output, shape index: {0}]
  %s4 = inlined_call_operand.vmem [shape: f32[6,2], index: 4, kind: output, shape index: {1}]
  %5 = xla_tuple %s3, %s4
  %s6 = sld [smem:[#allocation0]]
  $region30: #{tpu_custom_call.1} parent=0
    _
  %s8 = ssub.s32 1, %s6
  %s9 = scalar_select 0, %s8, %s6
  $region1: #{tpu_custom_call.1} parent=0
    #allocation2 [shape = 'u8[512]{0}', space=vmem, size = 0x400, scoped, tag = 'output window, operand 0, single buffered']
    #allocation3 [shape = 's32[1]{0}', space=sflag, size = 0x4, scoped, tag = 'scoped memory for tpu_custom_call.1']
    %10 = vsyncpa [#allocation3], 0
    // Predicated region
    $region2: #{tpu_custom_call.1} parent=1 // pred_check
      _
    $region3: #{tpu_custom_call.1} parent=1 // pred_check_branch
      %12 = sbr.rel (0) target = $region5
    $region4: #{tpu_custom_call.1} parent=1 // pred_region
      _
    $region5: #{tpu_custom_call.1} parent=1 // pred_fallthru
      _
    // Predicated region
    $region6: #{tpu_custom_call.1} parent=1 // pred_check
      _
    $region7: #{tpu_custom_call.1} parent=1 // pred_check_branch
      %14 = sbr.rel (0) target = $region9
    $region8: #{tpu_custom_call.1} parent=1 // pred_region
      _
    $region9: #{tpu_custom_call.1} parent=1 // pred_fallthru
      _
    // Predicated region
    $region10: #{tpu_custom_call.1} parent=1 // pred_check
      _
    $region11: #{tpu_custom_call.1} parent=1 // pred_check_branch
      %16 = sbr.rel (0) target = $region13
    $region12: #{tpu_custom_call.1} parent=1 // pred_region
      _
    $region13: #{tpu_custom_call.1} parent=1 // pred_fallthru
      _
    %v17 = vld [vmem:[%s0] sm:$0xff]
    %v18 = vld [vmem:[%s0 + $0x8] sm:$0x3]
    %s19 = scalar_lea.vmem %s0, 16
    %v20 = vld [vmem:[%s19] sm:$0xff]
    %v21 = vld [vmem:[%s19 + $0x8] sm:$0x3]
    %s22 = scalar_lea.vmem %s0, 32
    %v23 = vld [vmem:[%s22] sm:$0xff]
    %v24 = vld [vmem:[%s22 + $0x8] sm:$0x3]
    %s25 = scalar_lea.vmem %s0, 48
    %v26 = vld [vmem:[%s25] sm:$0xff]
    %v27 = vld [vmem:[%s25 + $0x8] sm:$0x3]
    %v28 = vmul.f32 %v17, %v20
    %v29 = vmul.f32 %v18, %v21
    %v30 = vmul.f32 %v17, %v23
    %v31 = vmul.f32 %v18, %v24
    %v32 = vmul.f32 %v17, %v26
    %v33 = vmul.f32 %v18, %v27
    %v34 = vmul.f32 %v20, %v23
    %v35 = vmul.f32 %v21, %v24
    %v36 = vmul.f32 %v20, %v26
    %v37 = vmul.f32 %v21, %v27
    %v38 = vmul.f32 %v23, %v26
    %v39 = vmul.f32 %v24, %v27
    %vm42 = vcmask 1041408
    %v43 = vrot.slane %v30, 6
    %v44 = vrot.slane %v31, 6
    %v45 = vsel %vm42, %v43, %v44
    %vm50 = vcmask 1043456
    %v51 = vrot.slane %v32, 4
    %v52 = vrot.slane %v33, 4
    %v53 = vsel %vm50, %v51, %v52
    %vm58 = vcmask 1045504
    %v59 = vrot.slane %v34, 2
    %v60 = vrot.slane %v35, 2
    %v61 = vsel %vm58, %v59, %v60
    %v66 = vrot.slane %v38, 6
    %v67 = vrot.slane %v39, 6
    %v68 = vsel %vm42, %v66, %v67
    %v71 = vsel %vm42, %v29, %v43
    %v72 = vsel %vm50, %v45, %v51
    %v73 = vsel %vm58, %v53, %v59
    %v74 = vsel %vm42, %v37, %v66
    %v75 = vsel %vm50, %v68, 1.0
    %v76 = vld [vmem:[%s1] sm:$0xff]
    %v77 = vld [vmem:[%s1 + $0x8] sm:$0xff]
    %v78 = vld [vmem:[%s1 + $0x10] sm:$0xff]
    %v79 = vld [vmem:[%s1 + $0x18] sm:$0xff]
    %v80 = vld [vmem:[%s1 + $0x20] sm:$0xff]
    %v81 = vld [vmem:[%s1 + $0x28] sm:$0xff]
    %v82 = vld [vmem:[%s1 + $0x30] sm:$0xff]
    %v83 = vld [vmem:[%s1 + $0x38] sm:$0xff]
    %v84 = vld [vmem:[%s1 + $0x40] sm:$0x3f]
    %vm85 = vcmask 498688
    %v87 = vsel %vm85, %v76, 0
    %v90 = vsel %vm85, %v77, 0
    %v93 = vsel %vm85, %v78, 0
    %v96 = vsel %vm85, %v79, 0
    %v99 = vsel %vm85, %v80, 0
    %v102 = vsel %vm85, %v81, 0
    %v105 = vsel %vm85, %v82, 0
    %v108 = vsel %vm85, %v83, 0
    %v111 = vsel %vm85, %v84, 0
    %vm113 = vcmask 1044480
    %v115 = vsel %vm113, %v75, 0
    %117 = vmatprep.subr.mxu0 0.0
    %118 = vmatpush1.msra.mxu0 %v28
    %119 = vmatprep.subr.mxu0 0.0
    %120 = vmatpush1.msra.mxu0 %v71
    %121 = vmatprep.subr.mxu0 0.0
    %122 = vmatpush1.msra.mxu0 %v72
    %123 = vmatprep.subr.mxu0 0.0
    %124 = vmatpush1.msra.mxu0 %v73
    %125 = vmatprep.subr.mxu0 0.0
    %126 = vmatpush1.msra.mxu0 %v61
    %127 = vmatprep.subr.mxu0 0.0
    %128 = vmatpush1.msra.mxu0 %v36
    %129 = vmatprep.subr.mxu0 0.0
    %130 = vmatpush1.msra.mxu0 %v74
    %131 = vmatprep.subr.mxu0 0.0
    %132 = vmatpush1.msra.mxu0 %v115
    %133 = vmatprep.subr.mxu0 0.0
    %134 = vmatpush1.msra.mxu0 0.0
    %135 = vmatprep.subr.mxu0 0.0
    %136 = vmatpush1.msra.mxu0 0.0
    %137 = vmatprep.subr.mxu0 0.0
    %138 = vmatpush1.msra.mxu0 0.0
    %139 = vmatprep.subr.mxu0 0.0
    %140 = vmatpush1.msra.mxu0 0.0
    %141 = vmatprep.subr.mxu0 0.0
    %142 = vmatpush1.msra.mxu0 0.0
    %143 = vmatprep.subr.mxu0 0.0
    %144 = vmatpush1.msra.mxu0 0.0
    %145 = vmatprep.subr.mxu0 0.0
    %146 = vmatpush1.msra.mxu0 0.0
    %147 = vmatprep.subr.mxu0 0.0
    %148 = vmatpush1.msra.mxu0 0.0
    %149 = vmatprep.subr.mxu0 0.0
    %150 = vmatpush1.msra.mxu0 0.0
    %151 = vmatprep.subr.mxu0 0.0
    %152 = vmatpush1.msra.mxu0 0.0
    %153 = vmatprep.subr.mxu0 0.0
    %154 = vmatpush1.msra.mxu0 0.0
    %155 = vmatprep.subr.mxu0 0.0
    %156 = vmatpush1.msra.mxu0 0.0
    %157 = vmatprep.subr.mxu0 0.0
    %158 = vmatpush1.msra.mxu0 0.0
    %159 = vmatprep.subr.mxu0 0.0
    %160 = vmatpush1.msra.mxu0 0.0
    %161 = vmatprep.subr.mxu0 0.0
    %162 = vmatpush1.msra.mxu0 0.0
    %163 = vmatprep.subr.mxu0 0.0
    %164 = vmatpush1.msra.mxu0 0.0
    %165 = vmatprep.subr.mxu0 0.0
    %166 = vmatpush1.msra.mxu0 0.0
    %167 = vmatprep.subr.mxu0 0.0
    %168 = vmatpush1.msra.mxu0 0.0
    %169 = vmatprep.subr.mxu0 0.0
    %170 = vmatpush1.msra.mxu0 0.0
    %171 = vmatprep.subr.mxu0 0.0
    %172 = vmatpush1.msra.mxu0 0.0
    %173 = vmatprep.subr.mxu0 0.0
    %174 = vmatpush1.msra.mxu0 0.0
    %175 = vmatprep.subr.mxu0 0.0
    %176 = vmatpush1.msra.mxu0 0.0
    %177 = vmatprep.subr.mxu0 0.0
    %178 = vmatpush1.msra.mxu0 0.0
    %179 = vmatprep.subr.mxu0 0.0
    %180 = vmatpush1.msra.mxu0 0.0
    %181 = vmatprep.mubr.f32.mxu0 0.0
    %182 = vmatmul.mubr.f32.gmra.mrb[0].mxu0 %v87
    %v183 = vpop.f32.mrb[0].mxu0
    %v184 = vadd.f32 0.0, %v183
    %v185 = vpop.f32.mrb[0].mxu0
    %186 = vmatprep.mubr.f32.mxu0 0.0
    %187 = vmatmul.mubr.f32.gmra.mrb[0].mxu0 %v90
    %v188 = vpop.f32.mrb[0].mxu0
    %v189 = vadd.f32 0.0, %v188
    %v190 = vpop.f32.mrb[0].mxu0
    %191 = vmatprep.mubr.f32.mxu0 0.0
    %192 = vmatmul.mubr.f32.gmra.mrb[0].mxu0 %v93
    %v193 = vpop.f32.mrb[0].mxu0
    %v194 = vadd.f32 0.0, %v193
    %v195 = vpop.f32.mrb[0].mxu0
    %196 = vmatprep.mubr.f32.mxu0 0.0
    %197 = vmatmul.mubr.f32.gmra.mrb[0].mxu0 %v96
    %v198 = vpop.f32.mrb[0].mxu0
    %v199 = vadd.f32 0.0, %v198
    %v200 = vpop.f32.mrb[0].mxu0
    %201 = vmatprep.mubr.f32.mxu0 0.0
    %202 = vmatmul.mubr.f32.gmra.mrb[0].mxu0 %v99
    %v203 = vpop.f32.mrb[0].mxu0
    %v204 = vadd.f32 0.0, %v203
    %v205 = vpop.f32.mrb[0].mxu0
    %206 = vmatprep.mubr.f32.mxu0 0.0
    %207 = vmatmul.mubr.f32.gmra.mrb[0].mxu0 %v102
    %v208 = vpop.f32.mrb[0].mxu0
    %v209 = vadd.f32 0.0, %v208
    %v210 = vpop.f32.mrb[0].mxu0
    %211 = vmatprep.mubr.f32.mxu0 0.0
    %212 = vmatmul.mubr.f32.gmra.mrb[0].mxu0 %v105
    %v213 = vpop.f32.mrb[0].mxu0
    %v214 = vadd.f32 0.0, %v213
    %v215 = vpop.f32.mrb[0].mxu0
    %216 = vmatprep.mubr.f32.mxu0 0.0
    %217 = vmatmul.mubr.f32.gmra.mrb[0].mxu0 %v108
    %v218 = vpop.f32.mrb[0].mxu0
    %v219 = vadd.f32 0.0, %v218
    %v220 = vpop.f32.mrb[0].mxu0
    %221 = vmatprep.mubr.f32.mxu0 0.0
    %222 = vmatmul.mubr.f32.gmra.mrb[0].mxu0 %v111
    %v223 = vpop.f32.mrb[0].mxu0
    %v224 = vadd.f32 0.0, %v223
    %v225 = vpop.f32.mrb[0].mxu0
    %226 = vdwg.mxu0
    %v227 = vmax.f32 %v184, 0.0
    %v228 = vmax.f32 %v189, 0.0
    %v229 = vmax.f32 %v194, 0.0
    %v230 = vmax.f32 %v199, 0.0
    %v231 = vmax.f32 %v204, 0.0
    %v232 = vmax.f32 %v209, 0.0
    %v233 = vmax.f32 %v214, 0.0
    %v234 = vmax.f32 %v219, 0.0
    %v235 = vld [vmem:[%s2] sm:$0x3f]
    %vm236 = vcmask 523264
    %v238 = vsel %vm236, %v235, 0
    %240 = vmatprep.subr.mxu0 0.0
    %241 = vmatpush1.msra.mxu0 %v227
    %242 = vmatprep.subr.mxu0 0.0
    %243 = vmatpush1.msra.mxu0 %v228
    %244 = vmatprep.subr.mxu0 0.0
    %245 = vmatpush1.msra.mxu0 %v229
    %246 = vmatprep.subr.mxu0 0.0
    %247 = vmatpush1.msra.mxu0 %v230
    %248 = vmatprep.subr.mxu0 0.0
    %249 = vmatpush1.msra.mxu0 %v231
    %250 = vmatprep.subr.mxu0 0.0
    %251 = vmatpush1.msra.mxu0 %v232
    %252 = vmatprep.subr.mxu0 0.0
    %253 = vmatpush1.msra.mxu0 %v233
    %254 = vmatprep.subr.mxu0 0.0
    %255 = vmatpush1.msra.mxu0 %v234
    %256 = vmatprep.subr.mxu0 0.0
    %257 = vmatpush1.msra.mxu0 0.0
    %258 = vmatprep.subr.mxu0 0.0
    %259 = vmatpush1.msra.mxu0 0.0
    %260 = vmatprep.subr.mxu0 0.0
    %261 = vmatpush1.msra.mxu0 0.0
    %262 = vmatprep.subr.mxu0 0.0
    %263 = vmatpush1.msra.mxu0 0.0
    %264 = vmatprep.subr.mxu0 0.0
    %265 = vmatpush1.msra.mxu0 0.0
    %266 = vmatprep.subr.mxu0 0.0
    %267 = vmatpush1.msra.mxu0 0.0
    %268 = vmatprep.subr.mxu0 0.0
    %269 = vmatpush1.msra.mxu0 0.0
    %270 = vmatprep.subr.mxu0 0.0
    %271 = vmatpush1.msra.mxu0 0.0
    %272 = vmatprep.subr.mxu0 0.0
    %273 = vmatpush1.msra.mxu0 0.0
    %274 = vmatprep.subr.mxu0 0.0
    %275 = vmatpush1.msra.mxu0 0.0
    %276 = vmatprep.subr.mxu0 0.0
    %277 = vmatpush1.msra.mxu0 0.0
    %278 = vmatprep.subr.mxu0 0.0
    %279 = vmatpush1.msra.mxu0 0.0
    %280 = vmatprep.subr.mxu0 0.0
    %281 = vmatpush1.msra.mxu0 0.0
    %282 = vmatprep.subr.mxu0 0.0
    %283 = vmatpush1.msra.mxu0 0.0
    %284 = vmatprep.subr.mxu0 0.0
    %285 = vmatpush1.msra.mxu0 0.0
    %286 = vmatprep.subr.mxu0 0.0
    %287 = vmatpush1.msra.mxu0 0.0
    %288 = vmatprep.subr.mxu0 0.0
    %289 = vmatpush1.msra.mxu0 0.0
    %290 = vmatprep.subr.mxu0 0.0
    %291 = vmatpush1.msra.mxu0 0.0
    %292 = vmatprep.subr.mxu0 0.0
    %293 = vmatpush1.msra.mxu0 0.0
    %294 = vmatprep.subr.mxu0 0.0
    %295 = vmatpush1.msra.mxu0 0.0
    %296 = vmatprep.subr.mxu0 0.0
    %297 = vmatpush1.msra.mxu0 0.0
    %298 = vmatprep.subr.mxu0 0.0
    %299 = vmatpush1.msra.mxu0 0.0
    %300 = vmatprep.subr.mxu0 0.0
    %301 = vmatpush1.msra.mxu0 0.0
    %302 = vmatprep.subr.mxu0 0.0
    %303 = vmatpush1.msra.mxu0 0.0
    %304 = vmatprep.mubr.f32.mxu0 0.0
    %305 = vmatmul.mubr.f32.gmra.mrb[0].mxu0 %v238
    %v306 = vpop.f32.mrb[0].mxu0
    %v307 = vadd.f32 0.0, %v306
    %v308 = vpop.f32.mrb[0].mxu0
    %309 = vdwg.mxu0
    %v310 = vsel %vm58, %v307, -inf
    %v311 = vrot.slane %v310, 4
    %v312 = vmax.f32 %v310, %v311
    %v313 = vrot.slane %v312, 2
    %v314 = vmax.f32 %v312, %v313
    %v315 = vrot.slane %v314, 1
    %v316 = vmax.f32 %v314, %v315
    %v317 = vsub.f32 %v307, %v316
    %v318 = vmul.f32 %v317, 1.442695
    %v319 = vpow.pop %v318
    %v320 = vsel %vm58, %v319, 0.0
    %v321 = vrot.slane %v320, 4
    %v322 = vadd.f32 %v320, %v321
    %v323 = vrot.slane %v322, 2
    %v324 = vadd.f32 %v322, %v323
    %v325 = vrot.slane %v324, 1
    %v326 = vadd.f32 %v324, %v325
    %v327 = vrcp.pop %v326
    %v328 = vmul.f32 %v319, %v327
    %329 = vst [vmem:[%s4] sm:$0x3f] %v328
    %v330 = vmul.f32 %v328, %v224
    %v331 = vsel %vm58, %v330, 0.0
    %v332 = vrot.slane %v331, 4
    %v333 = vadd.f32 %v331, %v332
    %v334 = vrot.slane %v333, 2
    %v335 = vadd.f32 %v333, %v334
    %v336 = vrot.slane %v335, 1
    %v337 = vadd.f32 %v335, %v336
    %338 = vst [vmem:[#allocation2] sm:$0x1] %v337
    // Predicated region
    $region14: #{tpu_custom_call.1} parent=1 // pred_check
      _
    $region15: #{tpu_custom_call.1} parent=1 // pred_check_branch
      %340 = sbr.rel (0) target = $region17
    $region16: #{tpu_custom_call.1} parent=1 // pred_region
      %s342 = ssub.s32 16, 16
      %343 = vsyncadd [#allocation3], %s342
      %s345 = sshll.u32 [#allocation2], 4
      %s346 = int_to_ptr.vmem [resolvable:$true] %s345
      %348 = dma.vmem_to_hbm [thread:$0]  %s346, 16, %s3, [#allocation3]
    $region17: #{tpu_custom_call.1} parent=1 // pred_fallthru
      _
    // Predicated region
    $region18: #{tpu_custom_call.1} parent=1 // pred_check
      _
    $region19: #{tpu_custom_call.1} parent=1 // pred_check_branch
      %350 = sbr.rel (0) target = $region21
    $region20: #{tpu_custom_call.1} parent=1 // pred_region
      _
    $region21: #{tpu_custom_call.1} parent=1 // pred_fallthru
      _
    // Predicated region
    $region22: #{tpu_custom_call.1} parent=1 // pred_check
      _
    $region23: #{tpu_custom_call.1} parent=1 // pred_check_branch
      %352 = sbr.rel (0) target = $region25
    $region24: #{tpu_custom_call.1} parent=1 // pred_region
      %353 = dma.done [#allocation3], 16
    $region25: #{tpu_custom_call.1} parent=1 // pred_fallthru
      _
    // Predicated region
    $region26: #{tpu_custom_call.1} parent=1 // pred_check
      _
    $region27: #{tpu_custom_call.1} parent=1 // pred_check_branch
      %355 = sbr.rel (0) target = $region29
    $region28: #{tpu_custom_call.1} parent=1 // pred_region
      _
    $region29: #{tpu_custom_call.1} parent=1 // pred_fallthru
      _
    %356 = vsyncpa [#allocation3], 1

</llo_original>
